<compile_context>
chip_gen: v6e
topology: v6e:2x2x1
jax: 0.10.0
libtpu: 0.0.40
codegen_flags: <defaults>
</compile_context>

<pallas_src>
import functools

import jax
import jax.numpy as jnp
from jax import lax
from jax.experimental import pallas as pl
from jax.experimental.pallas import tpu as pltpu


def _round_up(a: int, b: int) -> int:
    return (a + b - 1) // b * b


def _vmem_capacity_bytes() -> int:
    """Physical VMEM per TensorCore, with conservative fallbacks."""
    try:
        cap = int(pltpu.get_tpu_info().vmem_capacity_bytes)
        if cap > 0:
            return cap
    except Exception:
        pass
    try:
        kind = jax.devices()[0].device_kind.lower()
        if "v7" in kind:
            return 64 << 20
    except Exception:
        pass
    return 128 << 20


def _num_tensorcores() -> int:
    try:
        kind = jax.devices()[0].device_kind.lower()
        if "v7" in kind:
            return 2
    except Exception:
        pass
    return 1


def _choose_tiles(n: int, v: int, h: int, itemsize: int, vmem_limit_bytes: int):
    """Pick (tile_m, tile_v) to maximize W reuse within the VMEM budget.

    W HBM traffic = ceil(N / tile_m) * V * H bytes, so tile_m is the
    arithmetic-intensity lever; tile_v only reduces grid-step overhead.
    """
    tile_m = min(1024, _round_up(n, 8))
    tile_v = min(1024, _round_up(v, 128))

    num_tc = _num_tensorcores()
    if num_tc > 1 and n > 256 * num_tc:
        # Keep >= 1 row block per TensorCore so the "parallel" axis feeds both
        # v7x cores.
        tile_m = min(tile_m, max(256, _round_up(-(-n // num_tc), 256)))

    def vmem_cost(tm, tv):
        x_bytes = 2 * tm * h * itemsize      # conservatively assume 2 buffers
        w_bytes = 2 * tv * h * itemsize      # double-buffered W stream
        tmp_bytes = 3 * tm * tv * 4          # f32 logits + exp/select temps
        small = 16 * tm * 4                  # labels / output / m,l,t scratch
        return x_bytes + w_bytes + tmp_bytes + small

    budget = vmem_limit_bytes - (4 << 20)    # compiler-internal scratch headroom
    while vmem_cost(tile_m, tile_v) > budget and (tile_m > 256 or tile_v > 128):
        if tile_v >= tile_m and tile_v > 128:
            tile_v = max(128, tile_v // 2)   # shrink tile_v first: keep W reuse
        elif tile_m > 256:
            tile_m = max(256, tile_m // 2)
        else:
            break
    return tile_m, tile_v


def _fused_lm_head_ce_kernel(
    x_ref, w_ref, y_ref, loss_ref, m_sc, l_sc, t_sc,
    *, tile_v: int, v_actual: int, ignore_index: int,
):
    j = pl.program_id(1)
    nj = pl.num_programs(1)

    @pl.when(j == 0)
    def _():
        m_sc[...] = jnp.full_like(m_sc, -jnp.inf)
        l_sc[...] = jnp.zeros_like(l_sc)
        t_sc[...] = jnp.zeros_like(t_sc)

    # Native dtype (bf16) straight into the MXU; accumulate in f32.
    logits = lax.dot_general(
        x_ref[...], w_ref[...], (((1,), (1,)), ((), ())),
        preferred_element_type=jnp.float32,
    )  # (tile_m, tile_v)

    tm, tv = logits.shape
    local_ids = lax.broadcasted_iota(jnp.int32, (tm, tv), 1)  # tile-local cols
    y = y_ref[...]                          # (tile_m, 1) absolute targets
    y_local = y - j * tile_v                # target column within this tile

    def update(lg):
        # Online logsumexp over the vocab axis.
        m_prev = m_sc[...]
        m_new = jnp.maximum(m_prev, jnp.max(lg, axis=-1, keepdims=True))
        l_sc[...] = l_sc[...] * jnp.exp(m_prev - m_new) + jnp.sum(
            jnp.exp(lg - m_new), axis=-1, keepdims=True
        )
        m_sc[...] = m_new
        # Target logit: the target column appears in exactly one vocab tile.
        t_sc[...] += jnp.sum(
            jnp.where(local_ids == y_local, lg, 0.0), axis=-1, keepdims=True
        )

    ragged = (v_actual % tile_v) != 0  # static
    if ragged:
        is_last = j == nj - 1

        @pl.when(is_last)
        def _():
            valid_cols = v_actual - j * tile_v
            update(jnp.where(local_ids < valid_cols, logits, -jnp.inf))

        @pl.when(jnp.logical_not(is_last))
        def _():
            update(logits)
    else:
        update(logits)

    @pl.when(j == nj - 1)
    def _():
        lse = m_sc[...] + jnp.log(l_sc[...])
        per_row = lse - t_sc[...]
        ignored = y == ignore_index
        loss_ref[...] = jnp.where(ignored, 0.0, per_row)


def fused_linear_cross_entropy(
    weight, x, y, *, ignore_index=-100, tile_m=None, tile_v=None
):
    """weight: (V, H), x: (N, H), y: (N,) int. Mean CE over y != ignore_index."""
    n, h = x.shape
    v, h_w = weight.shape
    assert h == h_w

    itemsize = jnp.dtype(x.dtype).itemsize
    vmem_cap = _vmem_capacity_bytes()
    vmem_limit = int(vmem_cap) * 3 // 4   # 96 MiB on 128-MiB parts, 48 MiB on v7x

    auto_m, auto_v = _choose_tiles(n, v, h, itemsize, vmem_limit)
    if tile_m is None:
        tile_m = auto_m
    if tile_v is None:
        tile_v = auto_v

    y2 = y.astype(jnp.int32).reshape(n, 1)
    grid = (pl.cdiv(n, tile_m), pl.cdiv(v, tile_v))
    kernel = functools.partial(
        _fused_lm_head_ce_kernel,
        tile_v=tile_v,
        v_actual=v,
        ignore_index=ignore_index,
    )
    out_shape = jax.ShapeDtypeStruct((n, 1), jnp.float32)

    def build(single_buffer_resident: bool):
        # x and labels have index_map (i, 0): constant along the inner vocab
        # axis, so they only re-DMA at row-tile boundaries -> single buffer.
        extra = (
            dict(pipeline_mode=pl.Buffered(1)) if single_buffer_resident else {}
        )
        in_specs = [
            pl.BlockSpec((tile_m, h), lambda i, j: (i, 0), **extra),  # x rows
            pl.BlockSpec((tile_v, h), lambda i, j: (j, 0)),           # W vocab
            pl.BlockSpec((tile_m, 1), lambda i, j: (i, 0), **extra),  # labels
        ]
        return pl.pallas_call(
            kernel,
            out_shape=out_shape,
            grid_spec=pltpu.PrefetchScalarGridSpec(
                num_scalar_prefetch=0,
                grid=grid,
                in_specs=in_specs,
                out_specs=pl.BlockSpec((tile_m, 1), lambda i, j: (i, 0)),
                scratch_shapes=[
                    pltpu.VMEM((tile_m, 1), jnp.float32),  # running max
                    pltpu.VMEM((tile_m, 1), jnp.float32),  # running sum
                    pltpu.VMEM((tile_m, 1), jnp.float32),  # target logit
                ],
            ),
            compiler_params=pltpu.CompilerParams(
                dimension_semantics=("parallel", "arbitrary"),
                vmem_limit_bytes=vmem_limit,
            ),
        )

    try:
        per_row = build(True)(x, weight, y2)
    except Exception:
        # TODO(synk): drop this fallback once pl.Buffered(1) (single-buffered
        # resident x/label tiles) is guaranteed by the deployed jax version.
        per_row = build(False)(x, weight, y2)

    valid = y.astype(jnp.int32) != ignore_index
    n_valid = jnp.sum(valid).astype(jnp.float32)
    total = jnp.sum(per_row[:, 0])
    # TODO(synk): torch returns NaN for an all-ignored batch; we return 0.0.
    return jnp.where(n_valid > 0, total / n_valid, 0.0)


class TorchLMHeadCE:
    """JAX/Pallas port of the PyTorch TorchLMHeadCE module (forward only)."""

    def __init__(self, H: int, V: int, dtype, ignore_index: int = -100, key=None):
        if key is None:
            key = jax.random.PRNGKey(0)
        # torch.nn.Linear default init: U(-1/sqrt(H), 1/sqrt(H)), weight (V, H).
        bound = 1.0 / (H ** 0.5)
        self.weight = jax.random.uniform(
            key, (V, H), dtype=jnp.float32, minval=-bound, maxval=bound
        ).astype(dtype)
        self.ignore_index = ignore_index

    def __call__(self, x, y):
        return fused_linear_cross_entropy(
            self.weight, x, y, ignore_index=self.ignore_index
        )


def _reference_loss(weight, x, y, ignore_index=-100):
    logits = jnp.dot(x.astype(jnp.float32), weight.astype(jnp.float32).T)
    lse = jax.scipy.special.logsumexp(logits, axis=-1)
    y_safe = jnp.where(y == ignore_index, 0, y)
    tgt = jnp.take_along_axis(logits, y_safe[:, None], axis=-1)[:, 0]
    per = lse - tgt
    valid = y != ignore_index
    return jnp.sum(jnp.where(valid, per, 0.0)) / jnp.sum(valid)


if __name__ == "__main__":
    ignore_index = -100
    key = jax.random.PRNGKey(0)
    k_w, k_x, k_y, k_w2, k_x2, k_y2 = jax.random.split(key, 6)

    # --- Test 1: small auto-tiled case (B=2, T=8 -> N=16, H=32, V=256) ------
    H, V, N = 32, 256, 16
    model = TorchLMHeadCE(H, V, dtype=jnp.bfloat16, ignore_index=ignore_index, key=k_w)
    x = jax.random.normal(k_x, (N, H), dtype=jnp.float32).astype(jnp.bfloat16)
    y = jax.random.randint(k_y, (N,), 0, V, dtype=jnp.int32)
    y = y.at[3].set(ignore_index).at[10].set(ignore_index)  # padding tokens

    loss = jax.block_until_ready(model(x, y))
    ref = _reference_loss(model.weight, x, y, ignore_index=ignore_index)
    assert jnp.isfinite(loss)
    assert abs(float(loss) - float(ref)) < 2e-2 * max(1.0, abs(float(ref))), (
        float(loss), float(ref))

    # --- Test 2: ragged row and vocab tiles (N=20 w/ tile_m=8, V=300 w/ tile_v=128)
    H2, V2, N2 = 64, 300, 20
    bound2 = 1.0 / (H2 ** 0.5)
    w2 = jax.random.uniform(
        k_w2, (V2, H2), dtype=jnp.float32, minval=-bound2, maxval=bound2
    ).astype(jnp.bfloat16)
    x2 = jax.random.normal(k_x2, (N2, H2), dtype=jnp.float32).astype(jnp.bfloat16)
    y2 = jax.random.randint(k_y2, (N2,), 0, V2, dtype=jnp.int32)
    y2 = y2.at[0].set(ignore_index).at[7].set(ignore_index)

    loss2 = jax.block_until_ready(
        fused_linear_cross_entropy(
            w2, x2, y2, ignore_index=ignore_index, tile_m=8, tile_v=128
        )
    )
    ref2 = _reference_loss(w2, x2, y2, ignore_index=ignore_index)
    assert jnp.isfinite(loss2)
    assert abs(float(loss2) - float(ref2)) < 2e-2 * max(1.0, abs(float(ref2))), (
        float(loss2), float(ref2))

    print("KERNEL_OK")
</pallas_src>

<mosaic_0001>
module attributes {stable_mosaic.version = 11 : i64} {
  func.func @_fused_lm_head_ce_kernel(%arg0: i32, %arg1: i32, %arg2: memref<16x32xbf16, #tpu.memory_space<vmem>>, %arg3: memref<256x32xbf16, #tpu.memory_space<vmem>>, %arg4: memref<16x1xi32, #tpu.memory_space<vmem>>, %arg5: memref<16x1xf32, #tpu.memory_space<vmem>>, %arg6: memref<16x1xf32, #tpu.memory_space<vmem>>, %arg7: memref<16x1xf32, #tpu.memory_space<vmem>>, %arg8: memref<16x1xf32, #tpu.memory_space<vmem>>) attributes {dimension_semantics = [#tpu.dimension_semantics<parallel>, #tpu.dimension_semantics<arbitrary>], iteration_bounds = array<i64: 1, 1>, scalar_prefetch = 0 : i64, scratch_operands = 3 : i64, tpu.core_type = #tpu.core_type<tc>, window_params = [{pipeline_mode = #tpu.pipeline_mode<synchronous>, transform_indices = @transform_0, window_bounds = array<i64: 16, 32>}, {transform_indices = @transform_1, window_bounds = array<i64: 256, 32>}, {pipeline_mode = #tpu.pipeline_mode<synchronous>, transform_indices = @transform_2, window_bounds = array<i64: 16, 1>}, {transform_indices = @transform_3, window_bounds = array<i64: 16, 1>}]} {
    %c0_i32 = arith.constant 0 : i32
    %0 = arith.cmpi eq, %arg1, %c0_i32 : i32
    %1 = arith.extui %0 : i1 to i32
    %c0_i32_0 = arith.constant 0 : i32
    %2 = arith.cmpi ne, %1, %c0_i32_0 : i32
    scf.if %2 {
      %cst_24 = arith.constant 0xFF800000 : f32
      %39 = vector.broadcast %cst_24 : f32 to vector<16x1xf32>
      %c0_25 = arith.constant 0 : index
      %c0_26 = arith.constant 0 : index
      %40 = vector.load %arg6[%c0_25, %c0_26] : memref<16x1xf32, #tpu.memory_space<vmem>>, vector<16x1xf32>
      tpu.vector_store %arg6[%c0_25, %c0_26], %39 {strides = array<i32>} : memref<16x1xf32, #tpu.memory_space<vmem>>, vector<16x1xf32>,
      %cst_27 = arith.constant 0.000000e+00 : f32
      %41 = vector.broadcast %cst_27 : f32 to vector<16x1xf32>
      %c0_28 = arith.constant 0 : index
      %c0_29 = arith.constant 0 : index
      %42 = vector.load %arg7[%c0_28, %c0_29] : memref<16x1xf32, #tpu.memory_space<vmem>>, vector<16x1xf32>
      tpu.vector_store %arg7[%c0_28, %c0_29], %41 {strides = array<i32>} : memref<16x1xf32, #tpu.memory_space<vmem>>, vector<16x1xf32>,
      %cst_30 = arith.constant 0.000000e+00 : f32
      %43 = vector.broadcast %cst_30 : f32 to vector<16x1xf32>
      %c0_31 = arith.constant 0 : index
      %c0_32 = arith.constant 0 : index
      %44 = vector.load %arg8[%c0_31, %c0_32] : memref<16x1xf32, #tpu.memory_space<vmem>>, vector<16x1xf32>
      tpu.vector_store %arg8[%c0_31, %c0_32], %43 {strides = array<i32>} : memref<16x1xf32, #tpu.memory_space<vmem>>, vector<16x1xf32>,
    } else {
    }
    %c0 = arith.constant 0 : index
    %c0_1 = arith.constant 0 : index
    %3 = vector.load %arg2[%c0, %c0_1] : memref<16x32xbf16, #tpu.memory_space<vmem>>, vector<16x32xbf16>
    %c0_2 = arith.constant 0 : index
    %c0_3 = arith.constant 0 : index
    %4 = vector.load %arg3[%c0_2, %c0_3] : memref<256x32xbf16, #tpu.memory_space<vmem>>, vector<256x32xbf16>
    %cst = arith.constant dense<0.000000e+00> : vector<16x256xf32>
    %5 = tpu.matmul %3, %4, %cst {dimension_numbers = #tpu.dot_dimension_numbers<[1], [1], [0], [0], [0, 0, 1, 0], [], []>} : vector<16x32xbf16>, vector<256x32xbf16>, vector<16x256xf32> -> vector<16x256xf32>
    %6 = tpu.iota {dimensions = array<i32: 1>} : vector<16x256xi32>
    %c0_4 = arith.constant 0 : index
    %c0_5 = arith.constant 0 : index
    %7 = vector.load %arg4[%c0_4, %c0_5] : memref<16x1xi32, #tpu.memory_space<vmem>>, vector<16x1xi32>
    %c256_i32 = arith.constant 256 : i32
    %8 = arith.muli %arg1, %c256_i32 : i32
    %9 = vector.broadcast %8 : i32 to vector<16x1xi32>
    %10 = arith.subi %7, %9 : vector<16x1xi32>
    %c0_6 = arith.constant 0 : index
    %c0_7 = arith.constant 0 : index
    %11 = vector.load %arg6[%c0_6, %c0_7] : memref<16x1xf32, #tpu.memory_space<vmem>>, vector<16x1xf32>
    %cst_8 = arith.constant dense<0xFF800000> : vector<16xf32>
    %12 = vector.multi_reduction <maximumf>, %5, %cst_8 [1] : vector<16x256xf32> to vector<16xf32>
    %13 = vector.shape_cast %12 : vector<16xf32> to vector<16x1xf32>
    %14 = arith.maximumf %11, %13 : vector<16x1xf32>
    %c0_9 = arith.constant 0 : index
    %c0_10 = arith.constant 0 : index
    %15 = vector.load %arg7[%c0_9, %c0_10] : memref<16x1xf32, #tpu.memory_space<vmem>>, vector<16x1xf32>
    %16 = arith.subf %11, %14 : vector<16x1xf32>
    %17 = math.exp %16 : vector<16x1xf32>
    %18 = arith.mulf %15, %17 : vector<16x1xf32>
    %19 = vector.broadcast %14 : vector<16x1xf32> to vector<16x256xf32>
    %20 = arith.subf %5, %19 : vector<16x256xf32>
    %21 = math.exp %20 : vector<16x256xf32>
    %cst_11 = arith.constant dense<0.000000e+00> : vector<16xf32>
    %22 = vector.multi_reduction <add>, %21, %cst_11 [1] : vector<16x256xf32> to vector<16xf32>
    %23 = vector.shape_cast %22 : vector<16xf32> to vector<16x1xf32>
    %24 = arith.addf %18, %23 : vector<16x1xf32>
    %c0_12 = arith.constant 0 : index
    %c0_13 = arith.constant 0 : index
    %25 = vector.load %arg7[%c0_12, %c0_13] : memref<16x1xf32, #tpu.memory_space<vmem>>, vector<16x1xf32>
    tpu.vector_store %arg7[%c0_12, %c0_13], %24 {strides = array<i32>} : memref<16x1xf32, #tpu.memory_space<vmem>>, vector<16x1xf32>,
    %c0_14 = arith.constant 0 : index
    %c0_15 = arith.constant 0 : index
    %26 = vector.load %arg6[%c0_14, %c0_15] : memref<16x1xf32, #tpu.memory_space<vmem>>, vector<16x1xf32>
    tpu.vector_store %arg6[%c0_14, %c0_15], %14 {strides = array<i32>} : memref<16x1xf32, #tpu.memory_space<vmem>>, vector<16x1xf32>,
    %c0_16 = arith.constant 0 : index
    %c0_17 = arith.constant 0 : index
    %27 = vector.load %arg8[%c0_16, %c0_17] : memref<16x1xf32, #tpu.memory_space<vmem>>, vector<16x1xf32>
    %28 = vector.broadcast %10 : vector<16x1xi32> to vector<16x256xi32>
    %29 = arith.cmpi eq, %6, %28 : vector<16x256xi32>
    %cst_18 = arith.constant 0.000000e+00 : f32
    %30 = vector.broadcast %cst_18 : f32 to vector<16x256xf32>
    %31 = arith.select %29, %5, %30 : vector<16x256xi1>, vector<16x256xf32>
    %cst_19 = arith.constant dense<0.000000e+00> : vector<16xf32>
    %32 = vector.multi_reduction <add>, %31, %cst_19 [1] : vector<16x256xf32> to vector<16xf32>
    %33 = vector.shape_cast %32 : vector<16xf32> to vector<16x1xf32>
    %34 = arith.addf %27, %33 : vector<16x1xf32>
    %c0_20 = arith.constant 0 : index
    %c0_21 = arith.constant 0 : index
    %35 = vector.load %arg8[%c0_20, %c0_21] : memref<16x1xf32, #tpu.memory_space<vmem>>, vector<16x1xf32>
    tpu.vector_store %arg8[%c0_20, %c0_21], %34 {strides = array<i32>} : memref<16x1xf32, #tpu.memory_space<vmem>>, vector<16x1xf32>,
    %c0_i32_22 = arith.constant 0 : i32
    %36 = arith.cmpi eq, %arg1, %c0_i32_22 : i32
    %37 = arith.extui %36 : i1 to i32
    %c0_i32_23 = arith.constant 0 : i32
    %38 = arith.cmpi ne, %37, %c0_i32_23 : i32
    scf.if %38 {
      %c0_24 = arith.constant 0 : index
      %c0_25 = arith.constant 0 : index
      %39 = vector.load %arg6[%c0_24, %c0_25] : memref<16x1xf32, #tpu.memory_space<vmem>>, vector<16x1xf32>
      %c0_26 = arith.constant 0 : index
      %c0_27 = arith.constant 0 : index
      %40 = vector.load %arg7[%c0_26, %c0_27] : memref<16x1xf32, #tpu.memory_space<vmem>>, vector<16x1xf32>
      %41 = math.log %40 : vector<16x1xf32>
      %42 = arith.addf %39, %41 : vector<16x1xf32>
      %c0_28 = arith.constant 0 : index
      %c0_29 = arith.constant 0 : index
      %43 = vector.load %arg8[%c0_28, %c0_29] : memref<16x1xf32, #tpu.memory_space<vmem>>, vector<16x1xf32>
      %44 = arith.subf %42, %43 : vector<16x1xf32>
      %c-100_i32 = arith.constant -100 : i32
      %45 = vector.broadcast %c-100_i32 : i32 to vector<16x1xi32>
      %46 = arith.cmpi eq, %7, %45 : vector<16x1xi32>
      %cst_30 = arith.constant 0.000000e+00 : f32
      %47 = vector.broadcast %cst_30 : f32 to vector<16x1xf32>
      %48 = arith.select %46, %47, %44 : vector<16x1xi1>, vector<16x1xf32>
      %c0_31 = arith.constant 0 : index
      %c0_32 = arith.constant 0 : index
      %49 = vector.load %arg5[%c0_31, %c0_32] : memref<16x1xf32, #tpu.memory_space<vmem>>, vector<16x1xf32>
      tpu.vector_store %arg5[%c0_31, %c0_32], %48 {strides = array<i32>} : memref<16x1xf32, #tpu.memory_space<vmem>>, vector<16x1xf32>,
    } else {
    }
    return
  }
  func.func @transform_0(%arg0: i32, %arg1: i32) -> (i32, i32) {
    %c0_i32 = arith.constant 0 : i32
    %c0_i32_0 = arith.constant 0 : i32
    return %arg0, %c0_i32 : i32, i32
  }
  func.func @transform_1(%arg0: i32, %arg1: i32) -> (i32, i32) {
    %c0_i32 = arith.constant 0 : i32
    %c0_i32_0 = arith.constant 0 : i32
    return %arg1, %c0_i32 : i32, i32
  }
  func.func @transform_2(%arg0: i32, %arg1: i32) -> (i32, i32) {
    %c0_i32 = arith.constant 0 : i32
    %c0_i32_0 = arith.constant 0 : i32
    return %arg0, %c0_i32 : i32, i32
  }
  func.func @transform_3(%arg0: i32, %arg1: i32) -> (i32, i32) {
    %c0_i32 = arith.constant 0 : i32
    %c0_i32_0 = arith.constant 0 : i32
    return %arg0, %c0_i32 : i32, i32
  }
}

module attributes {stable_mosaic.version = 11 : i64} {
  func.func @_fused_lm_head_ce_kernel(%arg0: i32, %arg1: i32, %arg2: memref<16x32xbf16, #tpu.memory_space<vmem>>, %arg3: memref<256x32xbf16, #tpu.memory_space<vmem>>, %arg4: memref<16x1xi32, #tpu.memory_space<vmem>>, %arg5: memref<16x1xf32, #tpu.memory_space<vmem>>, %arg6: memref<16x1xf32, #tpu.memory_space<vmem>>, %arg7: memref<16x1xf32, #tpu.memory_space<vmem>>, %arg8: memref<16x1xf32, #tpu.memory_space<vmem>>) attributes {dimension_semantics = [#tpu.dimension_semantics<parallel>, #tpu.dimension_semantics<arbitrary>], iteration_bounds = array<i64: 1, 1>, scalar_prefetch = 0 : i64, scratch_operands = 3 : i64, tpu.core_type = #tpu.core_type<tc>, window_params = [{transform_indices = @transform_0, window_bounds = array<i64: 16, 32>}, {transform_indices = @transform_1, window_bounds = array<i64: 256, 32>}, {transform_indices = @transform_2, window_bounds = array<i64: 16, 1>}, {transform_indices = @transform_3, window_bounds = array<i64: 16, 1>}]} {
    %c0_i32 = arith.constant 0 : i32
    %0 = arith.cmpi eq, %arg1, %c0_i32 : i32
    %1 = arith.extui %0 : i1 to i32
    %c0_i32_0 = arith.constant 0 : i32
    %2 = arith.cmpi ne, %1, %c0_i32_0 : i32
    scf.if %2 {
      %cst_24 = arith.constant 0xFF800000 : f32
      %39 = vector.broadcast %cst_24 : f32 to vector<16x1xf32>
      %c0_25 = arith.constant 0 : index
      %c0_26 = arith.constant 0 : index
      %40 = vector.load %arg6[%c0_25, %c0_26] : memref<16x1xf32, #tpu.memory_space<vmem>>, vector<16x1xf32>
      tpu.vector_store %arg6[%c0_25, %c0_26], %39 {strides = array<i32>} : memref<16x1xf32, #tpu.memory_space<vmem>>, vector<16x1xf32>,
      %cst_27 = arith.constant 0.000000e+00 : f32
      %41 = vector.broadcast %cst_27 : f32 to vector<16x1xf32>
      %c0_28 = arith.constant 0 : index
      %c0_29 = arith.constant 0 : index
      %42 = vector.load %arg7[%c0_28, %c0_29] : memref<16x1xf32, #tpu.memory_space<vmem>>, vector<16x1xf32>
      tpu.vector_store %arg7[%c0_28, %c0_29], %41 {strides = array<i32>} : memref<16x1xf32, #tpu.memory_space<vmem>>, vector<16x1xf32>,
      %cst_30 = arith.constant 0.000000e+00 : f32
      %43 = vector.broadcast %cst_30 : f32 to vector<16x1xf32>
      %c0_31 = arith.constant 0 : index
      %c0_32 = arith.constant 0 : index
      %44 = vector.load %arg8[%c0_31, %c0_32] : memref<16x1xf32, #tpu.memory_space<vmem>>, vector<16x1xf32>
      tpu.vector_store %arg8[%c0_31, %c0_32], %43 {strides = array<i32>} : memref<16x1xf32, #tpu.memory_space<vmem>>, vector<16x1xf32>,
    } else {
    }
    %c0 = arith.constant 0 : index
    %c0_1 = arith.constant 0 : index
    %3 = vector.load %arg2[%c0, %c0_1] : memref<16x32xbf16, #tpu.memory_space<vmem>>, vector<16x32xbf16>
    %c0_2 = arith.constant 0 : index
    %c0_3 = arith.constant 0 : index
    %4 = vector.load %arg3[%c0_2, %c0_3] : memref<256x32xbf16, #tpu.memory_space<vmem>>, vector<256x32xbf16>
    %cst = arith.constant dense<0.000000e+00> : vector<16x256xf32>
    %5 = tpu.matmul %3, %4, %cst {dimension_numbers = #tpu.dot_dimension_numbers<[1], [1], [0], [0], [0, 0, 1, 0], [], []>} : vector<16x32xbf16>, vector<256x32xbf16>, vector<16x256xf32> -> vector<16x256xf32>
    %6 = tpu.iota {dimensions = array<i32: 1>} : vector<16x256xi32>
    %c0_4 = arith.constant 0 : index
    %c0_5 = arith.constant 0 : index
    %7 = vector.load %arg4[%c0_4, %c0_5] : memref<16x1xi32, #tpu.memory_space<vmem>>, vector<16x1xi32>
    %c256_i32 = arith.constant 256 : i32
    %8 = arith.muli %arg1, %c256_i32 : i32
    %9 = vector.broadcast %8 : i32 to vector<16x1xi32>
    %10 = arith.subi %7, %9 : vector<16x1xi32>
    %c0_6 = arith.constant 0 : index
    %c0_7 = arith.constant 0 : index
    %11 = vector.load %arg6[%c0_6, %c0_7] : memref<16x1xf32, #tpu.memory_space<vmem>>, vector<16x1xf32>
    %cst_8 = arith.constant dense<0xFF800000> : vector<16xf32>
    %12 = vector.multi_reduction <maximumf>, %5, %cst_8 [1] : vector<16x256xf32> to vector<16xf32>
    %13 = vector.shape_cast %12 : vector<16xf32> to vector<16x1xf32>
    %14 = arith.maximumf %11, %13 : vector<16x1xf32>
    %c0_9 = arith.constant 0 : index
    %c0_10 = arith.constant 0 : index
    %15 = vector.load %arg7[%c0_9, %c0_10] : memref<16x1xf32, #tpu.memory_space<vmem>>, vector<16x1xf32>
    %16 = arith.subf %11, %14 : vector<16x1xf32>
    %17 = math.exp %16 : vector<16x1xf32>
    %18 = arith.mulf %15, %17 : vector<16x1xf32>
    %19 = vector.broadcast %14 : vector<16x1xf32> to vector<16x256xf32>
    %20 = arith.subf %5, %19 : vector<16x256xf32>
    %21 = math.exp %20 : vector<16x256xf32>
    %cst_11 = arith.constant dense<0.000000e+00> : vector<16xf32>
    %22 = vector.multi_reduction <add>, %21, %cst_11 [1] : vector<16x256xf32> to vector<16xf32>
    %23 = vector.shape_cast %22 : vector<16xf32> to vector<16x1xf32>
    %24 = arith.addf %18, %23 : vector<16x1xf32>
    %c0_12 = arith.constant 0 : index
    %c0_13 = arith.constant 0 : index
    %25 = vector.load %arg7[%c0_12, %c0_13] : memref<16x1xf32, #tpu.memory_space<vmem>>, vector<16x1xf32>
    tpu.vector_store %arg7[%c0_12, %c0_13], %24 {strides = array<i32>} : memref<16x1xf32, #tpu.memory_space<vmem>>, vector<16x1xf32>,
    %c0_14 = arith.constant 0 : index
    %c0_15 = arith.constant 0 : index
    %26 = vector.load %arg6[%c0_14, %c0_15] : memref<16x1xf32, #tpu.memory_space<vmem>>, vector<16x1xf32>
    tpu.vector_store %arg6[%c0_14, %c0_15], %14 {strides = array<i32>} : memref<16x1xf32, #tpu.memory_space<vmem>>, vector<16x1xf32>,
    %c0_16 = arith.constant 0 : index
    %c0_17 = arith.constant 0 : index
    %27 = vector.load %arg8[%c0_16, %c0_17] : memref<16x1xf32, #tpu.memory_space<vmem>>, vector<16x1xf32>
    %28 = vector.broadcast %10 : vector<16x1xi32> to vector<16x256xi32>
    %29 = arith.cmpi eq, %6, %28 : vector<16x256xi32>
    %cst_18 = arith.constant 0.000000e+00 : f32
    %30 = vector.broadcast %cst_18 : f32 to vector<16x256xf32>
    %31 = arith.select %29, %5, %30 : vector<16x256xi1>, vector<16x256xf32>
    %cst_19 = arith.constant dense<0.000000e+00> : vector<16xf32>
    %32 = vector.multi_reduction <add>, %31, %cst_19 [1] : vector<16x256xf32> to vector<16xf32>
    %33 = vector.shape_cast %32 : vector<16xf32> to vector<16x1xf32>
    %34 = arith.addf %27, %33 : vector<16x1xf32>
    %c0_20 = arith.constant 0 : index
    %c0_21 = arith.constant 0 : index
    %35 = vector.load %arg8[%c0_20, %c0_21] : memref<16x1xf32, #tpu.memory_space<vmem>>, vector<16x1xf32>
    tpu.vector_store %arg8[%c0_20, %c0_21], %34 {strides = array<i32>} : memref<16x1xf32, #tpu.memory_space<vmem>>, vector<16x1xf32>,
    %c0_i32_22 = arith.constant 0 : i32
    %36 = arith.cmpi eq, %arg1, %c0_i32_22 : i32
    %37 = arith.extui %36 : i1 to i32
    %c0_i32_23 = arith.constant 0 : i32
    %38 = arith.cmpi ne, %37, %c0_i32_23 : i32
    scf.if %38 {
      %c0_24 = arith.constant 0 : index
      %c0_25 = arith.constant 0 : index
      %39 = vector.load %arg6[%c0_24, %c0_25] : memref<16x1xf32, #tpu.memory_space<vmem>>, vector<16x1xf32>
      %c0_26 = arith.constant 0 : index
      %c0_27 = arith.constant 0 : index
      %40 = vector.load %arg7[%c0_26, %c0_27] : memref<16x1xf32, #tpu.memory_space<vmem>>, vector<16x1xf32>
      %41 = math.log %40 : vector<16x1xf32>
      %42 = arith.addf %39, %41 : vector<16x1xf32>
      %c0_28 = arith.constant 0 : index
      %c0_29 = arith.constant 0 : index
      %43 = vector.load %arg8[%c0_28, %c0_29] : memref<16x1xf32, #tpu.memory_space<vmem>>, vector<16x1xf32>
      %44 = arith.subf %42, %43 : vector<16x1xf32>
      %c-100_i32 = arith.constant -100 : i32
      %45 = vector.broadcast %c-100_i32 : i32 to vector<16x1xi32>
      %46 = arith.cmpi eq, %7, %45 : vector<16x1xi32>
      %cst_30 = arith.constant 0.000000e+00 : f32
      %47 = vector.broadcast %cst_30 : f32 to vector<16x1xf32>
      %48 = arith.select %46, %47, %44 : vector<16x1xi1>, vector<16x1xf32>
      %c0_31 = arith.constant 0 : index
      %c0_32 = arith.constant 0 : index
      %49 = vector.load %arg5[%c0_31, %c0_32] : memref<16x1xf32, #tpu.memory_space<vmem>>, vector<16x1xf32>
      tpu.vector_store %arg5[%c0_31, %c0_32], %48 {strides = array<i32>} : memref<16x1xf32, #tpu.memory_space<vmem>>, vector<16x1xf32>,
    } else {
    }
    return
  }
  func.func @transform_0(%arg0: i32, %arg1: i32) -> (i32, i32) {
    %c0_i32 = arith.constant 0 : i32
    %c0_i32_0 = arith.constant 0 : i32
    return %arg0, %c0_i32 : i32, i32
  }
  func.func @transform_1(%arg0: i32, %arg1: i32) -> (i32, i32) {
    %c0_i32 = arith.constant 0 : i32
    %c0_i32_0 = arith.constant 0 : i32
    return %arg1, %c0_i32 : i32, i32
  }
  func.func @transform_2(%arg0: i32, %arg1: i32) -> (i32, i32) {
    %c0_i32 = arith.constant 0 : i32
    %c0_i32_0 = arith.constant 0 : i32
    return %arg0, %c0_i32 : i32, i32
  }
  func.func @transform_3(%arg0: i32, %arg1: i32) -> (i32, i32) {
    %c0_i32 = arith.constant 0 : i32
    %c0_i32_0 = arith.constant 0 : i32
    return %arg0, %c0_i32 : i32, i32
  }
}

</mosaic_0001>

<llo_original>
// kernel: tpu_custom_call.1
$region0: #{tpu_custom_call.1}
  #allocation0 [shape = 'u32[]', space=smem, size = 0x4, offset = 0x4, fixed_abs, tag = 'smem constant byte address 0x4 - core index']
  #allocation1 [shape = 'u32[144,128]{1,0:T(1,128)}', space=vmem, size = 0x12000, scoped, tag = 'internal scratch']
  #allocation2 [shape = 'f32[16,1]{1,0:T(8,128)}', space=vmem, size = 0x2000, scoped, tag = 'scratch operand']
  #allocation3 [shape = 'f32[16,1]{1,0:T(8,128)}', space=vmem, size = 0x2000, scoped, tag = 'scratch operand']
  #allocation4 [shape = 'f32[16,1]{1,0:T(8,128)}', space=vmem, size = 0x2000, scoped, tag = 'scratch operand']
  %s0 = inlined_call_operand.vmem [shape: bf16[16,32], index: 0, kind: input, shape index: {}]
  %s1 = inlined_call_operand.vmem [shape: bf16[256,32], index: 1, kind: input, shape index: {}]
  %s2 = inlined_call_operand.vmem [shape: s32[16,1], index: 2, kind: input, shape index: {}]
  %s3 = inlined_call_operand.vmem [shape: f32[16,1], index: 3, kind: output, shape index: {}]
  %s4 = sld [smem:[#allocation0]]
  $region30: #{tpu_custom_call.1} parent=0
    _
  %s6 = ssub.s32 1, %s4
  %s7 = scalar_select 0, %s6, %s4
  // Predicated region
  $region2: #{tpu_custom_call.1} parent=0 // pred_check
    _
  $region3: #{tpu_custom_call.1} parent=0 // pred_check_branch
    %9 = sbr.rel (0) target = $region5
  $region4: #{tpu_custom_call.1} parent=0 // pred_region
    _
  $region5: #{tpu_custom_call.1} parent=0 // pred_fallthru
    _
  // Predicated region
  $region6: #{tpu_custom_call.1} parent=0 // pred_check
    _
  $region7: #{tpu_custom_call.1} parent=0 // pred_check_branch
    %11 = sbr.rel (0) target = $region9
  $region8: #{tpu_custom_call.1} parent=0 // pred_region
    _
  $region9: #{tpu_custom_call.1} parent=0 // pred_fallthru
    _
  // Predicated region
  $region10: #{tpu_custom_call.1} parent=0 // pred_check
    _
  $region11: #{tpu_custom_call.1} parent=0 // pred_check_branch
    %13 = sbr.rel (0) target = $region13
  $region12: #{tpu_custom_call.1} parent=0 // pred_region
    _
  $region13: #{tpu_custom_call.1} parent=0 // pred_fallthru
    _
  %p15 = scmp.eq.s32.totalorder 0, 0
  // Predicated region
  $region14: #{tpu_custom_call.1} parent=0 // pred_check
    %p16 = pneg %p15
  $region15: #{tpu_custom_call.1} parent=0 // pred_check_branch
    %18 = sbr.rel (%p16) target = $region17
  $region16: #{tpu_custom_call.1} parent=0 // pred_region
    %vm19 = vcmask 7168
    %20 = vst.msk [vmem:[#allocation2] sm:$0xff] %vm19, -inf
    %21 = vst.msk [vmem:[#allocation2 + $0x8] sm:$0xff] %vm19, -inf
    %22 = vst.msk [vmem:[#allocation3] sm:$0xff] %vm19, 0.0
    %23 = vst.msk [vmem:[#allocation3 + $0x8] sm:$0xff] %vm19, 0.0
    %24 = vst.msk [vmem:[#allocation4] sm:$0xff] %vm19, 0.0
    %25 = vst.msk [vmem:[#allocation4 + $0x8] sm:$0xff] %vm19, 0.0
  $region17: #{tpu_custom_call.1} parent=0 // pred_fallthru
    _
  %v26 = vld [vmem:[%s0] sm:$0xf]
  %v27 = vld [vmem:[%s0 + $0x4] sm:$0xf]
  %v28 = vld [vmem:[%s1] sm:$0xf]
  %v29 = vld [vmem:[%s1 + $0x4] sm:$0xf]
  %v30 = vld [vmem:[%s1 + $0x8] sm:$0xf]
  %v31 = vld [vmem:[%s1 + $0xc] sm:$0xf]
  %v32 = vld [vmem:[%s1 + $0x10] sm:$0xf]
  %v33 = vld [vmem:[%s1 + $0x14] sm:$0xf]
  %v34 = vld [vmem:[%s1 + $0x18] sm:$0xf]
  %v35 = vld [vmem:[%s1 + $0x1c] sm:$0xf]
  %v36 = vld [vmem:[%s1 + $0x20] sm:$0xf]
  %v37 = vld [vmem:[%s1 + $0x24] sm:$0xf]
  %v38 = vld [vmem:[%s1 + $0x28] sm:$0xf]
  %v39 = vld [vmem:[%s1 + $0x2c] sm:$0xf]
  %v40 = vld [vmem:[%s1 + $0x30] sm:$0xf]
  %v41 = vld [vmem:[%s1 + $0x34] sm:$0xf]
  %v42 = vld [vmem:[%s1 + $0x38] sm:$0xf]
  %v43 = vld [vmem:[%s1 + $0x3c] sm:$0xf]
  %v44 = vld [vmem:[%s1 + $0x40] sm:$0xf]
  %v45 = vld [vmem:[%s1 + $0x44] sm:$0xf]
  %v46 = vld [vmem:[%s1 + $0x48] sm:$0xf]
  %v47 = vld [vmem:[%s1 + $0x4c] sm:$0xf]
  %v48 = vld [vmem:[%s1 + $0x50] sm:$0xf]
  %v49 = vld [vmem:[%s1 + $0x54] sm:$0xf]
  %v50 = vld [vmem:[%s1 + $0x58] sm:$0xf]
  %v51 = vld [vmem:[%s1 + $0x5c] sm:$0xf]
  %v52 = vld [vmem:[%s1 + $0x60] sm:$0xf]
  %v53 = vld [vmem:[%s1 + $0x64] sm:$0xf]
  %v54 = vld [vmem:[%s1 + $0x68] sm:$0xf]
  %v55 = vld [vmem:[%s1 + $0x6c] sm:$0xf]
  %v56 = vld [vmem:[%s1 + $0x70] sm:$0xf]
  %v57 = vld [vmem:[%s1 + $0x74] sm:$0xf]
  %v58 = vld [vmem:[%s1 + $0x78] sm:$0xf]
  %v59 = vld [vmem:[%s1 + $0x7c] sm:$0xf]
  %v62 = vunpack.c.l.b16 %v26
  %v63 = vunpack.c.l.b16 %v27
  %v64 = vpack.c.b16 %v63, %v62
  %v97 = vunpack.c.l.b16 %v28
  %v98 = vunpack.c.l.b16 %v29
  %v99 = vunpack.c.l.b16 %v30
  %v100 = vunpack.c.l.b16 %v31
  %v101 = vunpack.c.l.b16 %v32
  %v102 = vunpack.c.l.b16 %v33
  %v103 = vunpack.c.l.b16 %v34
  %v104 = vunpack.c.l.b16 %v35
  %v105 = vunpack.c.l.b16 %v36
  %v106 = vunpack.c.l.b16 %v37
  %v107 = vunpack.c.l.b16 %v38
  %v108 = vunpack.c.l.b16 %v39
  %v109 = vunpack.c.l.b16 %v40
  %v110 = vunpack.c.l.b16 %v41
  %v111 = vunpack.c.l.b16 %v42
  %v112 = vunpack.c.l.b16 %v43
  %v113 = vunpack.c.l.b16 %v44
  %v114 = vunpack.c.l.b16 %v45
  %v115 = vunpack.c.l.b16 %v46
  %v116 = vunpack.c.l.b16 %v47
  %v117 = vunpack.c.l.b16 %v48
  %v118 = vunpack.c.l.b16 %v49
  %v119 = vunpack.c.l.b16 %v50
  %v120 = vunpack.c.l.b16 %v51
  %v121 = vunpack.c.l.b16 %v52
  %v122 = vunpack.c.l.b16 %v53
  %v123 = vunpack.c.l.b16 %v54
  %v124 = vunpack.c.l.b16 %v55
  %v125 = vunpack.c.l.b16 %v56
  %v126 = vunpack.c.l.b16 %v57
  %v127 = vunpack.c.l.b16 %v58
  %v128 = vunpack.c.l.b16 %v59
  %v129 = vpack.c.b16 %v98, %v97
  %v130 = vpack.c.b16 %v100, %v99
  %v131 = vpack.c.b16 %v102, %v101
  %v132 = vpack.c.b16 %v104, %v103
  %v133 = vpack.c.b16 %v106, %v105
  %v134 = vpack.c.b16 %v108, %v107
  %v135 = vpack.c.b16 %v110, %v109
  %v136 = vpack.c.b16 %v112, %v111
  %v137 = vpack.c.b16 %v114, %v113
  %v138 = vpack.c.b16 %v116, %v115
  %v139 = vpack.c.b16 %v118, %v117
  %v140 = vpack.c.b16 %v120, %v119
  %v141 = vpack.c.b16 %v122, %v121
  %v142 = vpack.c.b16 %v124, %v123
  %v143 = vpack.c.b16 %v126, %v125
  %v144 = vpack.c.b16 %v128, %v127
  %vm145 = vcmask 261120
  %v147 = vsel %vm145, %v64, 0
  %v150 = vsel %vm145, %v129, 0
  %v153 = vsel %vm145, %v130, 0
  %v156 = vsel %vm145, %v131, 0
  %v159 = vsel %vm145, %v132, 0
  %v162 = vsel %vm145, %v133, 0
  %v165 = vsel %vm145, %v134, 0
  %v168 = vsel %vm145, %v135, 0
  %v171 = vsel %vm145, %v136, 0
  %v174 = vsel %vm145, %v137, 0
  %v177 = vsel %vm145, %v138, 0
  %v180 = vsel %vm145, %v139, 0
  %v183 = vsel %vm145, %v140, 0
  %v186 = vsel %vm145, %v141, 0
  %v189 = vsel %vm145, %v142, 0
  %v192 = vsel %vm145, %v143, 0
  %v195 = vsel %vm145, %v144, 0
  %197 = vmatprep.subr.bf16.mxu0 0
  %198 = vmatpush1.bf16.xpose.msra.mxu0 %v171
  %199 = vmatprep.subr.bf16.mxu0 0
  %200 = vmatpush1.bf16.xpose.msra.mxu0 %v168
  %201 = vmatprep.subr.bf16.mxu0 0
  %202 = vmatpush1.bf16.xpose.msra.mxu0 %v165
  %203 = vmatprep.subr.bf16.mxu0 0
  %204 = vmatpush1.bf16.xpose.msra.mxu0 %v162
  %205 = vmatprep.subr.bf16.mxu0 0
  %206 = vmatpush1.bf16.xpose.msra.mxu0 %v159
  %207 = vmatprep.subr.bf16.mxu0 0
  %208 = vmatpush1.bf16.xpose.msra.mxu0 %v156
  %209 = vmatprep.subr.bf16.mxu0 0
  %210 = vmatpush1.bf16.xpose.msra.mxu0 %v153
  %211 = vmatprep.subr.bf16.mxu0 0
  %212 = vmatpush1.bf16.xpose.msra.mxu0 %v150
  %213 = vmatprep.subr.bf16.mxu0 0
  %214 = vmatpush2.bf16.xpose.msra.mxu0 %v195
  %215 = vmatprep.subr.bf16.mxu0 0
  %216 = vmatpush2.bf16.xpose.msra.mxu0 %v192
  %217 = vmatprep.subr.bf16.mxu0 0
  %218 = vmatpush2.bf16.xpose.msra.mxu0 %v189
  %219 = vmatprep.subr.bf16.mxu0 0
  %220 = vmatpush2.bf16.xpose.msra.mxu0 %v186
  %221 = vmatprep.subr.bf16.mxu0 0
  %222 = vmatpush2.bf16.xpose.msra.mxu0 %v183
  %223 = vmatprep.subr.bf16.mxu0 0
  %224 = vmatpush2.bf16.xpose.msra.mxu0 %v180
  %225 = vmatprep.subr.bf16.mxu0 0
  %226 = vmatpush2.bf16.xpose.msra.mxu0 %v177
  %227 = vmatprep.subr.bf16.mxu0 0
  %228 = vmatpush2.bf16.xpose.msra.mxu0 %v174
  %229 = vmatprep.mubr.bf16.mxu0 0
  %230 = vmatmul.mubr.bf16.gmra.mxu0 %v147
  %v231 = vpop.f32.mrf.mxu0
  %v232 = vadd.f32 0.0, %v231
  %v233 = vpop.f32.mrf.mxu0
  %v234 = vadd.f32 0.0, %v233
  %v235 = vpop.f32.mrf.mxu0
  %v236 = vadd.f32 0.0, %v235
  %v237 = vpop.f32.mrf.mxu0
  %v238 = vadd.f32 0.0, %v237
  %239 = vdwg.mxu0
  %v240 = vlaneseq
  %v241 = vand.u32 %v240, 127
  %v242 = vadd.s32 %v241, 128
  %v243 = vld [vmem:[%s2] sm:$0xff]
  %v244 = vld [vmem:[%s2 + $0x8] sm:$0xff]
  %s245 = smul.u32 0, 256
  %v246 = vstv %s245
  %v247 = vsub.s32 %v243, %v246
  %v248 = vsub.s32 %v244, %v246
  %v249 = vld [vmem:[#allocation2] sm:$0xff]
  %v250 = vld [vmem:[#allocation2 + $0x8] sm:$0xff]
  %v251 = vmax.f32 %v232, %v234
  %252 = vmax.xlane.f32.xlu0 %v251
  %v253 = vpop.xlane.xlu0 %252
  %v254 = vmax.f32 %v236, %v238
  %255 = vmax.xlane.f32.xlu0 %v254
  %v256 = vpop.xlane.xlu0 %255
  %v257 = vmax.f32 %v249, %v253
  %v258 = vmax.f32 %v250, %v256
  %v259 = vld [vmem:[#allocation3] sm:$0xff]
  %v260 = vld [vmem:[#allocation3 + $0x8] sm:$0xff]
  %v261 = vsub.f32 %v249, %v257
  %v262 = vsub.f32 %v250, %v258
  %v263 = vmul.f32 %v261, 1.442695
  %v264 = vpow.pop %v263
  %v265 = vmul.f32 %v262, 1.442695
  %v266 = vpow.pop %v265
  %v267 = vmul.f32 %v259, %v264
  %v268 = vmul.f32 %v260, %v266
  %270 = vset.pattern.permute.xlu0 0
  %271 = vperm.xlu0 %270, %v257
  %v272 = vpop.permute.xlu0 %271
  %275 = vset.pattern.permute.xlu0 0
  %276 = vperm.xlu0 %275, %v258
  %v277 = vpop.permute.xlu0 %276
  %v279 = vsub.f32 %v232, %v272
  %v280 = vsub.f32 %v234, %v272
  %v281 = vsub.f32 %v236, %v277
  %v282 = vsub.f32 %v238, %v277
  %v283 = vmul.f32 %v279, 1.442695
  %v284 = vpow.pop %v283
  %v285 = vmul.f32 %v280, 1.442695
  %v286 = vpow.pop %v285
  %v287 = vmul.f32 %v281, 1.442695
  %v288 = vpow.pop %v287
  %v289 = vmul.f32 %v282, 1.442695
  %v290 = vpow.pop %v289
  %v291 = vadd.f32 %v284, %v286
  %292 = vadd.xlane.f32.xlu0 %v291
  %v293 = vpop.xlane.xlu0 %292
  %v294 = vadd.f32 %v288, %v290
  %295 = vadd.xlane.f32.xlu0 %v294
  %v296 = vpop.xlane.xlu0 %295
  %v297 = vadd.f32 %v267, %v293
  %v298 = vadd.f32 %v268, %v296
  %vm299 = vcmask 7168
  %300 = vst.msk [vmem:[#allocation3] sm:$0xff] %vm299, %v297
  %301 = vst.msk [vmem:[#allocation3 + $0x8] sm:$0xff] %vm299, %v298
  %302 = vst.msk [vmem:[#allocation2] sm:$0xff] %vm299, %v257
  %303 = vst.msk [vmem:[#allocation2 + $0x8] sm:$0xff] %vm299, %v258
  %v304 = vld [vmem:[#allocation4] sm:$0xff]
  %v305 = vld [vmem:[#allocation4 + $0x8] sm:$0xff]
  %306 = vset.pattern.permute.xlu0 0
  %307 = vperm.xlu0 %306, %v247
  %v308 = vpop.permute.xlu0 %307
  %309 = vset.pattern.permute.xlu0 0
  %310 = vperm.xlu0 %309, %v248
  %v311 = vpop.permute.xlu0 %310
  %vm312 = vcmp.eq.s32.totalorder %v241, %v308
  %vm313 = vcmp.eq.s32.totalorder %v242, %v308
  %vm314 = vcmp.eq.s32.totalorder %v241, %v311
  %vm315 = vcmp.eq.s32.totalorder %v242, %v311
  %v316 = vsel %vm312, %v232, 0.0
  %v317 = vsel %vm313, %v234, 0.0
  %v318 = vsel %vm314, %v236, 0.0
  %v319 = vsel %vm315, %v238, 0.0
  %v320 = vadd.f32 %v316, %v317
  %321 = vadd.xlane.f32.xlu0 %v320
  %v322 = vpop.xlane.xlu0 %321
  %v323 = vadd.f32 %v318, %v319
  %324 = vadd.xlane.f32.xlu0 %v323
  %v325 = vpop.xlane.xlu0 %324
  %v326 = vadd.f32 %v304, %v322
  %v327 = vadd.f32 %v305, %v325
  %328 = vst.msk [vmem:[#allocation4] sm:$0xff] %vm299, %v326
  %329 = vst.msk [vmem:[#allocation4 + $0x8] sm:$0xff] %vm299, %v327
  // Predicated region
  $region18: #{tpu_custom_call.1} parent=0 // pred_check
    %p330 = pneg %p15
  $region19: #{tpu_custom_call.1} parent=0 // pred_check_branch
    %332 = sbr.rel (%p330) target = $region21
  $region20: #{tpu_custom_call.1} parent=0 // pred_region
    %v333 = vld [vmem:[#allocation2] sm:$0xff]
    %v334 = vld [vmem:[#allocation2 + $0x8] sm:$0xff]
    %v335 = vld [vmem:[#allocation3] sm:$0xff]
    %v336 = vld [vmem:[#allocation3 + $0x8] sm:$0xff]
    %v337 = vlog2.pop %v335
    %v338 = vmul.f32 %v337, 0.6931472
    %v339 = vlog2.pop %v336
    %v340 = vmul.f32 %v339, 0.6931472
    %v341 = vadd.f32 %v333, %v338
    %v342 = vadd.f32 %v334, %v340
    %v343 = vld [vmem:[#allocation4] sm:$0xff]
    %v344 = vld [vmem:[#allocation4 + $0x8] sm:$0xff]
    %v345 = vsub.f32 %v341, %v343
    %v346 = vsub.f32 %v342, %v344
    %vm347 = vcmp.eq.s32.totalorder %v243, 4294967196
    %vm348 = vcmp.eq.s32.totalorder %v244, 4294967196
    %v349 = vsel %vm347, 0.0, %v345
    %v350 = vsel %vm348, 0.0, %v346
    %351 = vst.msk [vmem:[%s3] sm:$0xff] %vm299, %v349
    %352 = vst.msk [vmem:[%s3 + $0x8] sm:$0xff] %vm299, %v350
  $region21: #{tpu_custom_call.1} parent=0 // pred_fallthru
    _
  // Predicated region
  $region22: #{tpu_custom_call.1} parent=0 // pred_check
    _
  $region23: #{tpu_custom_call.1} parent=0 // pred_check_branch
    %354 = sbr.rel (0) target = $region25
  $region24: #{tpu_custom_call.1} parent=0 // pred_region
    _
  $region25: #{tpu_custom_call.1} parent=0 // pred_fallthru
    _
  // Predicated region
  $region26: #{tpu_custom_call.1} parent=0 // pred_check
    _
  $region27: #{tpu_custom_call.1} parent=0 // pred_check_branch
    %356 = sbr.rel (0) target = $region29
  $region28: #{tpu_custom_call.1} parent=0 // pred_region
    _
  $region29: #{tpu_custom_call.1} parent=0 // pred_fallthru
    _

// kernel: tpu_custom_call.1
$region0: #{tpu_custom_call.1}
  #allocation0 [shape = 'u32[]', space=smem, size = 0x4, offset = 0x4, fixed_abs, tag = 'smem constant byte address 0x4 - core index']
  #allocation1 [shape = 'u32[144,128]{1,0:T(1,128)}', space=vmem, size = 0x12000, scoped, tag = 'internal scratch']
  #allocation2 [shape = 'f32[16,1]{1,0:T(8,128)}', space=vmem, size = 0x2000, scoped, tag = 'scratch operand']
  #allocation3 [shape = 'f32[16,1]{1,0:T(8,128)}', space=vmem, size = 0x2000, scoped, tag = 'scratch operand']
  #allocation4 [shape = 'f32[16,1]{1,0:T(8,128)}', space=vmem, size = 0x2000, scoped, tag = 'scratch operand']
  %s0 = inlined_call_operand.vmem [shape: bf16[16,32], index: 0, kind: input, shape index: {}]
  %s1 = inlined_call_operand.vmem [shape: bf16[256,32], index: 1, kind: input, shape index: {}]
  %s2 = inlined_call_operand.vmem [shape: s32[16,1], index: 2, kind: input, shape index: {}]
  %s3 = inlined_call_operand.vmem [shape: f32[16,1], index: 3, kind: output, shape index: {}]
  %s4 = sld [smem:[#allocation0]]
  $region30: #{tpu_custom_call.1} parent=0
    _
  %s6 = ssub.s32 1, %s4
  %s7 = scalar_select 0, %s6, %s4
  // Predicated region
  $region2: #{tpu_custom_call.1} parent=0 // pred_check
    _
  $region3: #{tpu_custom_call.1} parent=0 // pred_check_branch
    %9 = sbr.rel (0) target = $region5
  $region4: #{tpu_custom_call.1} parent=0 // pred_region
    _
  $region5: #{tpu_custom_call.1} parent=0 // pred_fallthru
    _
  // Predicated region
  $region6: #{tpu_custom_call.1} parent=0 // pred_check
    _
  $region7: #{tpu_custom_call.1} parent=0 // pred_check_branch
    %11 = sbr.rel (0) target = $region9
  $region8: #{tpu_custom_call.1} parent=0 // pred_region
    _
  $region9: #{tpu_custom_call.1} parent=0 // pred_fallthru
    _
  // Predicated region
  $region10: #{tpu_custom_call.1} parent=0 // pred_check
    _
  $region11: #{tpu_custom_call.1} parent=0 // pred_check_branch
    %13 = sbr.rel (0) target = $region13
  $region12: #{tpu_custom_call.1} parent=0 // pred_region
    _
  $region13: #{tpu_custom_call.1} parent=0 // pred_fallthru
    _
  %p15 = scmp.eq.s32.totalorder 0, 0
  // Predicated region
  $region14: #{tpu_custom_call.1} parent=0 // pred_check
    %p16 = pneg %p15
  $region15: #{tpu_custom_call.1} parent=0 // pred_check_branch
    %18 = sbr.rel (%p16) target = $region17
  $region16: #{tpu_custom_call.1} parent=0 // pred_region
    %vm19 = vcmask 7168
    %20 = vst.msk [vmem:[#allocation2] sm:$0xff] %vm19, -inf
    %21 = vst.msk [vmem:[#allocation2 + $0x8] sm:$0xff] %vm19, -inf
    %22 = vst.msk [vmem:[#allocation3] sm:$0xff] %vm19, 0.0
    %23 = vst.msk [vmem:[#allocation3 + $0x8] sm:$0xff] %vm19, 0.0
    %24 = vst.msk [vmem:[#allocation4] sm:$0xff] %vm19, 0.0
    %25 = vst.msk [vmem:[#allocation4 + $0x8] sm:$0xff] %vm19, 0.0
  $region17: #{tpu_custom_call.1} parent=0 // pred_fallthru
    _
  %v26 = vld [vmem:[%s0] sm:$0xf]
  %v27 = vld [vmem:[%s0 + $0x4] sm:$0xf]
  %v28 = vld [vmem:[%s1] sm:$0xf]
  %v29 = vld [vmem:[%s1 + $0x4] sm:$0xf]
  %v30 = vld [vmem:[%s1 + $0x8] sm:$0xf]
  %v31 = vld [vmem:[%s1 + $0xc] sm:$0xf]
  %v32 = vld [vmem:[%s1 + $0x10] sm:$0xf]
  %v33 = vld [vmem:[%s1 + $0x14] sm:$0xf]
  %v34 = vld [vmem:[%s1 + $0x18] sm:$0xf]
  %v35 = vld [vmem:[%s1 + $0x1c] sm:$0xf]
  %v36 = vld [vmem:[%s1 + $0x20] sm:$0xf]
  %v37 = vld [vmem:[%s1 + $0x24] sm:$0xf]
  %v38 = vld [vmem:[%s1 + $0x28] sm:$0xf]
  %v39 = vld [vmem:[%s1 + $0x2c] sm:$0xf]
  %v40 = vld [vmem:[%s1 + $0x30] sm:$0xf]
  %v41 = vld [vmem:[%s1 + $0x34] sm:$0xf]
  %v42 = vld [vmem:[%s1 + $0x38] sm:$0xf]
  %v43 = vld [vmem:[%s1 + $0x3c] sm:$0xf]
  %v44 = vld [vmem:[%s1 + $0x40] sm:$0xf]
  %v45 = vld [vmem:[%s1 + $0x44] sm:$0xf]
  %v46 = vld [vmem:[%s1 + $0x48] sm:$0xf]
  %v47 = vld [vmem:[%s1 + $0x4c] sm:$0xf]
  %v48 = vld [vmem:[%s1 + $0x50] sm:$0xf]
  %v49 = vld [vmem:[%s1 + $0x54] sm:$0xf]
  %v50 = vld [vmem:[%s1 + $0x58] sm:$0xf]
  %v51 = vld [vmem:[%s1 + $0x5c] sm:$0xf]
  %v52 = vld [vmem:[%s1 + $0x60] sm:$0xf]
  %v53 = vld [vmem:[%s1 + $0x64] sm:$0xf]
  %v54 = vld [vmem:[%s1 + $0x68] sm:$0xf]
  %v55 = vld [vmem:[%s1 + $0x6c] sm:$0xf]
  %v56 = vld [vmem:[%s1 + $0x70] sm:$0xf]
  %v57 = vld [vmem:[%s1 + $0x74] sm:$0xf]
  %v58 = vld [vmem:[%s1 + $0x78] sm:$0xf]
  %v59 = vld [vmem:[%s1 + $0x7c] sm:$0xf]
  %v62 = vunpack.c.l.b16 %v26
  %v63 = vunpack.c.l.b16 %v27
  %v64 = vpack.c.b16 %v63, %v62
  %v97 = vunpack.c.l.b16 %v28
  %v98 = vunpack.c.l.b16 %v29
  %v99 = vunpack.c.l.b16 %v30
  %v100 = vunpack.c.l.b16 %v31
  %v101 = vunpack.c.l.b16 %v32
  %v102 = vunpack.c.l.b16 %v33
  %v103 = vunpack.c.l.b16 %v34
  %v104 = vunpack.c.l.b16 %v35
  %v105 = vunpack.c.l.b16 %v36
  %v106 = vunpack.c.l.b16 %v37
  %v107 = vunpack.c.l.b16 %v38
  %v108 = vunpack.c.l.b16 %v39
  %v109 = vunpack.c.l.b16 %v40
  %v110 = vunpack.c.l.b16 %v41
  %v111 = vunpack.c.l.b16 %v42
  %v112 = vunpack.c.l.b16 %v43
  %v113 = vunpack.c.l.b16 %v44
  %v114 = vunpack.c.l.b16 %v45
  %v115 = vunpack.c.l.b16 %v46
  %v116 = vunpack.c.l.b16 %v47
  %v117 = vunpack.c.l.b16 %v48
  %v118 = vunpack.c.l.b16 %v49
  %v119 = vunpack.c.l.b16 %v50
  %v120 = vunpack.c.l.b16 %v51
  %v121 = vunpack.c.l.b16 %v52
  %v122 = vunpack.c.l.b16 %v53
  %v123 = vunpack.c.l.b16 %v54
  %v124 = vunpack.c.l.b16 %v55
  %v125 = vunpack.c.l.b16 %v56
  %v126 = vunpack.c.l.b16 %v57
  %v127 = vunpack.c.l.b16 %v58
  %v128 = vunpack.c.l.b16 %v59
  %v129 = vpack.c.b16 %v98, %v97
  %v130 = vpack.c.b16 %v100, %v99
  %v131 = vpack.c.b16 %v102, %v101
  %v132 = vpack.c.b16 %v104, %v103
  %v133 = vpack.c.b16 %v106, %v105
  %v134 = vpack.c.b16 %v108, %v107
  %v135 = vpack.c.b16 %v110, %v109
  %v136 = vpack.c.b16 %v112, %v111
  %v137 = vpack.c.b16 %v114, %v113
  %v138 = vpack.c.b16 %v116, %v115
  %v139 = vpack.c.b16 %v118, %v117
  %v140 = vpack.c.b16 %v120, %v119
  %v141 = vpack.c.b16 %v122, %v121
  %v142 = vpack.c.b16 %v124, %v123
  %v143 = vpack.c.b16 %v126, %v125
  %v144 = vpack.c.b16 %v128, %v127
  %vm145 = vcmask 261120
  %v147 = vsel %vm145, %v64, 0
  %v150 = vsel %vm145, %v129, 0
  %v153 = vsel %vm145, %v130, 0
  %v156 = vsel %vm145, %v131, 0
  %v159 = vsel %vm145, %v132, 0
  %v162 = vsel %vm145, %v133, 0
  %v165 = vsel %vm145, %v134, 0
  %v168 = vsel %vm145, %v135, 0
  %v171 = vsel %vm145, %v136, 0
  %v174 = vsel %vm145, %v137, 0
  %v177 = vsel %vm145, %v138, 0
  %v180 = vsel %vm145, %v139, 0
  %v183 = vsel %vm145, %v140, 0
  %v186 = vsel %vm145, %v141, 0
  %v189 = vsel %vm145, %v142, 0
  %v192 = vsel %vm145, %v143, 0
  %v195 = vsel %vm145, %v144, 0
  %197 = vmatprep.subr.bf16.mxu0 0
  %198 = vmatpush1.bf16.xpose.msra.mxu0 %v171
  %199 = vmatprep.subr.bf16.mxu0 0
  %200 = vmatpush1.bf16.xpose.msra.mxu0 %v168
  %201 = vmatprep.subr.bf16.mxu0 0
  %202 = vmatpush1.bf16.xpose.msra.mxu0 %v165
  %203 = vmatprep.subr.bf16.mxu0 0
  %204 = vmatpush1.bf16.xpose.msra.mxu0 %v162
  %205 = vmatprep.subr.bf16.mxu0 0
  %206 = vmatpush1.bf16.xpose.msra.mxu0 %v159
  %207 = vmatprep.subr.bf16.mxu0 0
  %208 = vmatpush1.bf16.xpose.msra.mxu0 %v156
  %209 = vmatprep.subr.bf16.mxu0 0
  %210 = vmatpush1.bf16.xpose.msra.mxu0 %v153
  %211 = vmatprep.subr.bf16.mxu0 0
  %212 = vmatpush1.bf16.xpose.msra.mxu0 %v150
  %213 = vmatprep.subr.bf16.mxu0 0
  %214 = vmatpush2.bf16.xpose.msra.mxu0 %v195
  %215 = vmatprep.subr.bf16.mxu0 0
  %216 = vmatpush2.bf16.xpose.msra.mxu0 %v192
  %217 = vmatprep.subr.bf16.mxu0 0
  %218 = vmatpush2.bf16.xpose.msra.mxu0 %v189
  %219 = vmatprep.subr.bf16.mxu0 0
  %220 = vmatpush2.bf16.xpose.msra.mxu0 %v186
  %221 = vmatprep.subr.bf16.mxu0 0
  %222 = vmatpush2.bf16.xpose.msra.mxu0 %v183
  %223 = vmatprep.subr.bf16.mxu0 0
  %224 = vmatpush2.bf16.xpose.msra.mxu0 %v180
  %225 = vmatprep.subr.bf16.mxu0 0
  %226 = vmatpush2.bf16.xpose.msra.mxu0 %v177
  %227 = vmatprep.subr.bf16.mxu0 0
  %228 = vmatpush2.bf16.xpose.msra.mxu0 %v174
  %229 = vmatprep.mubr.bf16.mxu0 0
  %230 = vmatmul.mubr.bf16.gmra.mxu0 %v147
  %v231 = vpop.f32.mrf.mxu0
  %v232 = vadd.f32 0.0, %v231
  %v233 = vpop.f32.mrf.mxu0
  %v234 = vadd.f32 0.0, %v233
  %v235 = vpop.f32.mrf.mxu0
  %v236 = vadd.f32 0.0, %v235
  %v237 = vpop.f32.mrf.mxu0
  %v238 = vadd.f32 0.0, %v237
  %239 = vdwg.mxu0
  %v240 = vlaneseq
  %v241 = vand.u32 %v240, 127
  %v242 = vadd.s32 %v241, 128
  %v243 = vld [vmem:[%s2] sm:$0xff]
  %v244 = vld [vmem:[%s2 + $0x8] sm:$0xff]
  %s245 = smul.u32 0, 256
  %v246 = vstv %s245
  %v247 = vsub.s32 %v243, %v246
  %v248 = vsub.s32 %v244, %v246
  %v249 = vld [vmem:[#allocation2] sm:$0xff]
  %v250 = vld [vmem:[#allocation2 + $0x8] sm:$0xff]
  %v251 = vmax.f32 %v232, %v234
  %252 = vmax.xlane.f32.xlu0 %v251
  %v253 = vpop.xlane.xlu0 %252
  %v254 = vmax.f32 %v236, %v238
  %255 = vmax.xlane.f32.xlu0 %v254
  %v256 = vpop.xlane.xlu0 %255
  %v257 = vmax.f32 %v249, %v253
  %v258 = vmax.f32 %v250, %v256
  %v259 = vld [vmem:[#allocation3] sm:$0xff]
  %v260 = vld [vmem:[#allocation3 + $0x8] sm:$0xff]
  %v261 = vsub.f32 %v249, %v257
  %v262 = vsub.f32 %v250, %v258
  %v263 = vmul.f32 %v261, 1.442695
  %v264 = vpow.pop %v263
  %v265 = vmul.f32 %v262, 1.442695
  %v266 = vpow.pop %v265
  %v267 = vmul.f32 %v259, %v264
  %v268 = vmul.f32 %v260, %v266
  %270 = vset.pattern.permute.xlu0 0
  %271 = vperm.xlu0 %270, %v257
  %v272 = vpop.permute.xlu0 %271
  %275 = vset.pattern.permute.xlu0 0
  %276 = vperm.xlu0 %275, %v258
  %v277 = vpop.permute.xlu0 %276
  %v279 = vsub.f32 %v232, %v272
  %v280 = vsub.f32 %v234, %v272
  %v281 = vsub.f32 %v236, %v277
  %v282 = vsub.f32 %v238, %v277
  %v283 = vmul.f32 %v279, 1.442695
  %v284 = vpow.pop %v283
  %v285 = vmul.f32 %v280, 1.442695
  %v286 = vpow.pop %v285
  %v287 = vmul.f32 %v281, 1.442695
  %v288 = vpow.pop %v287
  %v289 = vmul.f32 %v282, 1.442695
  %v290 = vpow.pop %v289
  %v291 = vadd.f32 %v284, %v286
  %292 = vadd.xlane.f32.xlu0 %v291
  %v293 = vpop.xlane.xlu0 %292
  %v294 = vadd.f32 %v288, %v290
  %295 = vadd.xlane.f32.xlu0 %v294
  %v296 = vpop.xlane.xlu0 %295
  %v297 = vadd.f32 %v267, %v293
  %v298 = vadd.f32 %v268, %v296
  %vm299 = vcmask 7168
  %300 = vst.msk [vmem:[#allocation3] sm:$0xff] %vm299, %v297
  %301 = vst.msk [vmem:[#allocation3 + $0x8] sm:$0xff] %vm299, %v298
  %302 = vst.msk [vmem:[#allocation2] sm:$0xff] %vm299, %v257
  %303 = vst.msk [vmem:[#allocation2 + $0x8] sm:$0xff] %vm299, %v258
  %v304 = vld [vmem:[#allocation4] sm:$0xff]
  %v305 = vld [vmem:[#allocation4 + $0x8] sm:$0xff]
  %306 = vset.pattern.permute.xlu0 0
  %307 = vperm.xlu0 %306, %v247
  %v308 = vpop.permute.xlu0 %307
  %309 = vset.pattern.permute.xlu0 0
  %310 = vperm.xlu0 %309, %v248
  %v311 = vpop.permute.xlu0 %310
  %vm312 = vcmp.eq.s32.totalorder %v241, %v308
  %vm313 = vcmp.eq.s32.totalorder %v242, %v308
  %vm314 = vcmp.eq.s32.totalorder %v241, %v311
  %vm315 = vcmp.eq.s32.totalorder %v242, %v311
  %v316 = vsel %vm312, %v232, 0.0
  %v317 = vsel %vm313, %v234, 0.0
  %v318 = vsel %vm314, %v236, 0.0
  %v319 = vsel %vm315, %v238, 0.0
  %v320 = vadd.f32 %v316, %v317
  %321 = vadd.xlane.f32.xlu0 %v320
  %v322 = vpop.xlane.xlu0 %321
  %v323 = vadd.f32 %v318, %v319
  %324 = vadd.xlane.f32.xlu0 %v323
  %v325 = vpop.xlane.xlu0 %324
  %v326 = vadd.f32 %v304, %v322
  %v327 = vadd.f32 %v305, %v325
  %328 = vst.msk [vmem:[#allocation4] sm:$0xff] %vm299, %v326
  %329 = vst.msk [vmem:[#allocation4 + $0x8] sm:$0xff] %vm299, %v327
  // Predicated region
  $region18: #{tpu_custom_call.1} parent=0 // pred_check
    %p330 = pneg %p15
  $region19: #{tpu_custom_call.1} parent=0 // pred_check_branch
    %332 = sbr.rel (%p330) target = $region21
  $region20: #{tpu_custom_call.1} parent=0 // pred_region
    %v333 = vld [vmem:[#allocation2] sm:$0xff]
    %v334 = vld [vmem:[#allocation2 + $0x8] sm:$0xff]
    %v335 = vld [vmem:[#allocation3] sm:$0xff]
    %v336 = vld [vmem:[#allocation3 + $0x8] sm:$0xff]
    %v337 = vlog2.pop %v335
    %v338 = vmul.f32 %v337, 0.6931472
    %v339 = vlog2.pop %v336
    %v340 = vmul.f32 %v339, 0.6931472
    %v341 = vadd.f32 %v333, %v338
    %v342 = vadd.f32 %v334, %v340
    %v343 = vld [vmem:[#allocation4] sm:$0xff]
    %v344 = vld [vmem:[#allocation4 + $0x8] sm:$0xff]
    %v345 = vsub.f32 %v341, %v343
    %v346 = vsub.f32 %v342, %v344
    %vm347 = vcmp.eq.s32.totalorder %v243, 4294967196
    %vm348 = vcmp.eq.s32.totalorder %v244, 4294967196
    %v349 = vsel %vm347, 0.0, %v345
    %v350 = vsel %vm348, 0.0, %v346
    %351 = vst.msk [vmem:[%s3] sm:$0xff] %vm299, %v349
    %352 = vst.msk [vmem:[%s3 + $0x8] sm:$0xff] %vm299, %v350
  $region21: #{tpu_custom_call.1} parent=0 // pred_fallthru
    _
  // Predicated region
  $region22: #{tpu_custom_call.1} parent=0 // pred_check
    _
  $region23: #{tpu_custom_call.1} parent=0 // pred_check_branch
    %354 = sbr.rel (0) target = $region25
  $region24: #{tpu_custom_call.1} parent=0 // pred_region
    _
  $region25: #{tpu_custom_call.1} parent=0 // pred_fallthru
    _
  // Predicated region
  $region26: #{tpu_custom_call.1} parent=0 // pred_check
    _
  $region27: #{tpu_custom_call.1} parent=0 // pred_check_branch
    %356 = sbr.rel (0) target = $region29
  $region28: #{tpu_custom_call.1} parent=0 // pred_region
    _
  $region29: #{tpu_custom_call.1} parent=0 // pred_fallthru
    _

</llo_original>
